<compile_context>
chip_gen: v7x
topology: tpu7x:2x2x1
jax: 0.10.0
libtpu: 0.0.40
codegen_flags: <defaults>
</compile_context>

<pallas_src>
import functools

import jax
import jax.numpy as jnp
from jax.experimental import pallas as pl
from jax.experimental.pallas import tpu as pltpu

_LANE = 128
_SUBLANE = 8


def _round_up(x, m):
    return (x + m - 1) // m * m


def _cdiv(a, b):
    return (a + b - 1) // b


def _fused_mlp_kernel(x_ref, w_ref, b_ref, o_ref, *, relu_flags, compute_dtype,
                      f_pad):
    """Whole encoder->decoder stack fused; activations never leave VMEM/vregs.

    x_ref: (TILE_B, f_in)   raw input tile at its natural feature width
    w_ref: (L, F, F)        all layer weights, zero-padded, VMEM resident
    b_ref: (L, 1, F)        all layer biases (f32), zero-padded
    o_ref: (TILE_B, F_out)  lane-dense (multiple of 128) bf16 output tile
    """
    x = x_ref[...].astype(compute_dtype)
    tb, f_in = x.shape
    if f_in < f_pad:
        # Zero-extend to the common padded lane width in vregs.  Padded weight
        # rows/cols are zero, so the padding stays exactly zero layer to layer.
        act = jnp.concatenate(
            [x, jnp.zeros((tb, f_pad - f_in), compute_dtype)], axis=-1)
    else:
        act = x

    # TODO(synk): for deep stacks (L > ~8) replace this static unroll with a
    # lax.fori_loop over w_ref[l] / b_ref[l] to bound vreg live ranges.
    for l, relu in enumerate(relu_flags):
        y = jnp.dot(act, w_ref[l], preferred_element_type=jnp.float32)
        y = y + b_ref[l]                      # (1, F) f32 broadcasts over rows
        if relu:
            y = jnp.maximum(y, 0.0)
        # Carry the inter-layer activation in the compute dtype (bf16): the next
        # dot casts to it anyway and this halves vreg/VMEM spill traffic.
        act = y.astype(compute_dtype)

    o_ref[...] = act[:, :o_ref.shape[-1]].astype(o_ref.dtype)


def _init_linear(key, f_in, f_out, f_pad, param_dtype):
    """torch.nn.Linear-style init (uniform +-1/sqrt(f_in)), zero-padded to f_pad."""
    kw, kb = jax.random.split(key)
    bound = 1.0 / float(f_in) ** 0.5
    w = jax.random.uniform(kw, (f_in, f_out), jnp.float32, -bound, bound)
    b = jax.random.uniform(kb, (f_out,), jnp.float32, -bound, bound)
    w_p = jnp.zeros((f_pad, f_pad), param_dtype).at[:f_in, :f_out].set(
        w.astype(param_dtype))
    b_p = jnp.zeros((1, f_pad), jnp.float32).at[0, :f_out].set(b)
    return w_p, b_p


def build_autoencoder_params(key, input_size, hidden_sizes,
                             param_dtype=jnp.bfloat16):
    """Stacked, lane-padded params for the fused encoder+decoder kernel."""
    enc_dims = [input_size] + list(hidden_sizes)
    dec_dims = list(hidden_sizes[::-1]) + [input_size]
    layer_dims = (list(zip(enc_dims[:-1], enc_dims[1:])) +
                  list(zip(dec_dims[:-1], dec_dims[1:])))
    n_layers = len(layer_dims)
    # One common padded lane width so a single VMEM activation layout serves
    # every layer (all vreg / MXU passes fully dense).
    # TODO(synk): for strongly heterogeneous hidden sizes, pad each layer to its
    # own (round_up(f_in,128), round_up(f_out,128)) to shrink resident VMEM.
    f_pad = _round_up(max(input_size, *hidden_sizes), _LANE)

    ws, bs, relu = [], [], []
    for idx, (f_in, f_out) in enumerate(layer_dims):
        key, sub = jax.random.split(key)
        w_p, b_p = _init_linear(sub, f_in, f_out, f_pad, param_dtype)
        ws.append(w_p)
        bs.append(b_p)
        relu.append(idx != n_layers - 1)   # ReLU everywhere but the last layer
    return {
        "w": jnp.stack(ws),          # (L, F, F)  param_dtype (bf16 default)
        "b": jnp.stack(bs),          # (L, 1, F)  f32
        "relu": tuple(relu),
        "output_size": input_size,
    }


def autoencoder_forward(x, params, *, tile_b=1024):
    """x: (B, input_size) -> (B, input_size) reconstruction in x.dtype."""
    w, b, relu_flags = params["w"], params["b"], params["relu"]
    L, F, _ = w.shape
    B, f_in = x.shape
    out_size = params["output_size"]
    f_out_pad = _round_up(out_size, _LANE)       # lane-dense output stores
    out_dtype = jnp.bfloat16                     # halve output HBM traffic

    # Batch tiling: multiple of 8 sublanes, no bigger than the batch, and at
    # least 2 grid steps when possible so the "parallel" axis can shard across
    # both TensorCores on v7x.  The ragged last block (B % tile_b) is clipped by
    # Pallas, so no wrapper-side batch padding is needed.
    tile_b = max(_SUBLANE, _round_up(min(tile_b, B), _SUBLANE))
    if _cdiv(B, tile_b) < 2 and B > _SUBLANE:
        tile_b = _round_up(_cdiv(B, 2), _SUBLANE)
    grid = (_cdiv(B, tile_b),)

    # Generation-aware VMEM budget: double-buffered activation tiles + the
    # (double-buffered) resident parameter stack + in-kernel f32 headroom.
    in_bytes = tile_b * f_in * jnp.dtype(x.dtype).itemsize
    out_bytes = tile_b * f_out_pad * jnp.dtype(out_dtype).itemsize
    par_bytes = w.size * jnp.dtype(w.dtype).itemsize + b.size * jnp.dtype(b.dtype).itemsize
    act_bytes = tile_b * F * 4
    vmem_needed = 2 * (in_bytes + out_bytes + par_bytes) + 4 * act_bytes + (2 << 20)
    try:
        vmem_cap = int(pltpu.get_tpu_info().vmem_capacity_bytes)
    except Exception:
        vmem_cap = 64 << 20
    vmem_limit = int(min(max(vmem_needed, 32 << 20), int(vmem_cap * 0.75)))

    kernel = functools.partial(_fused_mlp_kernel,
                               relu_flags=relu_flags,
                               compute_dtype=w.dtype,
                               f_pad=F)

    out = pl.pallas_call(
        kernel,
        out_shape=jax.ShapeDtypeStruct((B, f_out_pad), out_dtype),
        grid=grid,
        in_specs=[
            # Natural feature width (== full array dim) -> no wrapper-side pad.
            pl.BlockSpec((tile_b, f_in), lambda i: (i, 0)),
            # Whole weight / bias stacks VMEM-resident (grid-invariant index).
            # TODO(synk): stream weights per layer (pltpu.emit_pipeline) or use
            # fp8 weights on v7x if L*F*F*2B approaches ~48 MiB.
            pl.BlockSpec((L, F, F), lambda i: (0, 0, 0)),
            pl.BlockSpec((L, 1, F), lambda i: (0, 0, 0)),
        ],
        out_specs=pl.BlockSpec((tile_b, f_out_pad), lambda i: (i, 0)),
        compiler_params=pltpu.CompilerParams(
            dimension_semantics=("parallel",),   # shards grid steps on v7x TCs
            vmem_limit_bytes=vmem_limit,
        ),
    )(x, w, b)

    # Only remaining wrapper op: a narrow slice (+ cast back to the caller's
    # dtype) of the lane-dense bf16 kernel output.
    return out[:, :out_size].astype(x.dtype)


def _reference_forward(x, params):
    """Pure-JAX reference replicating the kernel numerics (bf16 act/w, f32 acc)."""
    w, b = params["w"], params["b"]
    L, F, _ = w.shape
    cdt = w.dtype
    B, f_in = x.shape
    act = jnp.zeros((B, F), cdt).at[:, :f_in].set(x.astype(cdt))
    for l, relu in enumerate(params["relu"]):
        y = jnp.dot(act, w[l], preferred_element_type=jnp.float32) + b[l]
        if relu:
            y = jnp.maximum(y, 0.0)
        act = y.astype(cdt)
    return act[:, :params["output_size"]].astype(x.dtype)


if __name__ == "__main__":
    key = jax.random.PRNGKey(0)
    batch = 8
    input_size = 64
    hidden_sizes = [32, 16]

    k_params, k_x = jax.random.split(key)
    params = build_autoencoder_params(k_params, input_size, hidden_sizes)
    x = jax.random.normal(k_x, (batch, input_size), dtype=jnp.float32)

    out = jax.block_until_ready(autoencoder_forward(x, params))

    assert out.shape == (batch, input_size), out.shape
    assert out.dtype == jnp.float32, out.dtype

    ref = _reference_forward(x, params)
    err = float(jnp.max(jnp.abs(out.astype(jnp.float32) -
                                ref.astype(jnp.float32))))
    assert err < 2e-2, err

    print("KERNEL_OK")
</pallas_src>

<mosaic_0001>
module attributes {stable_mosaic.version = 11 : i64} {
  func.func @_fused_mlp_kernel(%arg0: i32, %arg1: memref<8x64xf32, #tpu.memory_space<vmem>>, %arg2: memref<4x128x128xbf16, #tpu.memory_space<vmem>>, %arg3: memref<4x1x128xf32, #tpu.memory_space<vmem>>, %arg4: memref<8x128xbf16, #tpu.memory_space<vmem>>) attributes {dimension_semantics = [#tpu.dimension_semantics<parallel>], iteration_bounds = array<i64: 1>, scalar_prefetch = 0 : i64, scratch_operands = 0 : i64, tpu.core_type = #tpu.core_type<tc>, window_params = [{transform_indices = @transform_0, window_bounds = array<i64: 8, 64>}, {pipeline_mode = #tpu.pipeline_mode<synchronous>, transform_indices = @transform_1, window_bounds = array<i64: 4, 128, 128>}, {pipeline_mode = #tpu.pipeline_mode<synchronous>, transform_indices = @transform_2, window_bounds = array<i64: 4, 1, 128>}, {transform_indices = @transform_3, window_bounds = array<i64: 8, 128>}]} {
    %c0 = arith.constant 0 : index
    %c0_0 = arith.constant 0 : index
    %0 = vector.load %arg1[%c0, %c0_0] : memref<8x64xf32, #tpu.memory_space<vmem>>, vector<8x64xf32>
    %1 = arith.truncf %0 : vector<8x64xf32> to vector<8x64xbf16>
    %cst = arith.constant 0.000000e+00 : bf16
    %2 = vector.broadcast %cst : bf16 to vector<8x64xbf16>
    %3 = tpu.concatenate %1, %2 in 1 : vector<8x64xbf16>, vector<8x64xbf16> -> vector<8x128xbf16>
    %c0_1 = arith.constant 0 : index
    %c0_2 = arith.constant 0 : index
    %c0_3 = arith.constant 0 : index
    %4 = vector.load %arg2[%c0_1, %c0_2, %c0_3] : memref<4x128x128xbf16, #tpu.memory_space<vmem>>, vector<1x128x128xbf16>
    %5 = vector.shape_cast %4 : vector<1x128x128xbf16> to vector<128x128xbf16>
    %cst_4 = arith.constant dense<0.000000e+00> : vector<8x128xf32>
    %6 = tpu.matmul %3, %5, %cst_4 {dimension_numbers = #tpu.dot_dimension_numbers<[1], [0], [0], [1], [0, 0, 1, 1], [], []>} : vector<8x128xbf16>, vector<128x128xbf16>, vector<8x128xf32> -> vector<8x128xf32>
    %c0_5 = arith.constant 0 : index
    %c0_6 = arith.constant 0 : index
    %c0_7 = arith.constant 0 : index
    %7 = vector.load %arg3[%c0_5, %c0_6, %c0_7] : memref<4x1x128xf32, #tpu.memory_space<vmem>>, vector<1x1x128xf32>
    %8 = vector.shape_cast %7 : vector<1x1x128xf32> to vector<1x128xf32>
    %9 = vector.broadcast %8 : vector<1x128xf32> to vector<8x128xf32>
    %10 = arith.addf %6, %9 : vector<8x128xf32>
    %cst_8 = arith.constant 0.000000e+00 : f32
    %11 = vector.broadcast %cst_8 : f32 to vector<8x128xf32>
    %12 = arith.maximumf %10, %11 : vector<8x128xf32>
    %13 = arith.truncf %12 : vector<8x128xf32> to vector<8x128xbf16>
    %c1 = arith.constant 1 : index
    %c0_9 = arith.constant 0 : index
    %c0_10 = arith.constant 0 : index
    %14 = vector.load %arg2[%c1, %c0_9, %c0_10] : memref<4x128x128xbf16, #tpu.memory_space<vmem>>, vector<1x128x128xbf16>
    %15 = vector.shape_cast %14 : vector<1x128x128xbf16> to vector<128x128xbf16>
    %cst_11 = arith.constant dense<0.000000e+00> : vector<8x128xf32>
    %16 = tpu.matmul %13, %15, %cst_11 {dimension_numbers = #tpu.dot_dimension_numbers<[1], [0], [0], [1], [0, 0, 1, 1], [], []>} : vector<8x128xbf16>, vector<128x128xbf16>, vector<8x128xf32> -> vector<8x128xf32>
    %c1_12 = arith.constant 1 : index
    %c0_13 = arith.constant 0 : index
    %c0_14 = arith.constant 0 : index
    %17 = vector.load %arg3[%c1_12, %c0_13, %c0_14] : memref<4x1x128xf32, #tpu.memory_space<vmem>>, vector<1x1x128xf32>
    %18 = vector.shape_cast %17 : vector<1x1x128xf32> to vector<1x128xf32>
    %19 = vector.broadcast %18 : vector<1x128xf32> to vector<8x128xf32>
    %20 = arith.addf %16, %19 : vector<8x128xf32>
    %cst_15 = arith.constant 0.000000e+00 : f32
    %21 = vector.broadcast %cst_15 : f32 to vector<8x128xf32>
    %22 = arith.maximumf %20, %21 : vector<8x128xf32>
    %23 = arith.truncf %22 : vector<8x128xf32> to vector<8x128xbf16>
    %c2 = arith.constant 2 : index
    %c0_16 = arith.constant 0 : index
    %c0_17 = arith.constant 0 : index
    %24 = vector.load %arg2[%c2, %c0_16, %c0_17] : memref<4x128x128xbf16, #tpu.memory_space<vmem>>, vector<1x128x128xbf16>
    %25 = vector.shape_cast %24 : vector<1x128x128xbf16> to vector<128x128xbf16>
    %cst_18 = arith.constant dense<0.000000e+00> : vector<8x128xf32>
    %26 = tpu.matmul %23, %25, %cst_18 {dimension_numbers = #tpu.dot_dimension_numbers<[1], [0], [0], [1], [0, 0, 1, 1], [], []>} : vector<8x128xbf16>, vector<128x128xbf16>, vector<8x128xf32> -> vector<8x128xf32>
    %c2_19 = arith.constant 2 : index
    %c0_20 = arith.constant 0 : index
    %c0_21 = arith.constant 0 : index
    %27 = vector.load %arg3[%c2_19, %c0_20, %c0_21] : memref<4x1x128xf32, #tpu.memory_space<vmem>>, vector<1x1x128xf32>
    %28 = vector.shape_cast %27 : vector<1x1x128xf32> to vector<1x128xf32>
    %29 = vector.broadcast %28 : vector<1x128xf32> to vector<8x128xf32>
    %30 = arith.addf %26, %29 : vector<8x128xf32>
    %cst_22 = arith.constant 0.000000e+00 : f32
    %31 = vector.broadcast %cst_22 : f32 to vector<8x128xf32>
    %32 = arith.maximumf %30, %31 : vector<8x128xf32>
    %33 = arith.truncf %32 : vector<8x128xf32> to vector<8x128xbf16>
    %c3 = arith.constant 3 : index
    %c0_23 = arith.constant 0 : index
    %c0_24 = arith.constant 0 : index
    %34 = vector.load %arg2[%c3, %c0_23, %c0_24] : memref<4x128x128xbf16, #tpu.memory_space<vmem>>, vector<1x128x128xbf16>
    %35 = vector.shape_cast %34 : vector<1x128x128xbf16> to vector<128x128xbf16>
    %cst_25 = arith.constant dense<0.000000e+00> : vector<8x128xf32>
    %36 = tpu.matmul %33, %35, %cst_25 {dimension_numbers = #tpu.dot_dimension_numbers<[1], [0], [0], [1], [0, 0, 1, 1], [], []>} : vector<8x128xbf16>, vector<128x128xbf16>, vector<8x128xf32> -> vector<8x128xf32>
    %c3_26 = arith.constant 3 : index
    %c0_27 = arith.constant 0 : index
    %c0_28 = arith.constant 0 : index
    %37 = vector.load %arg3[%c3_26, %c0_27, %c0_28] : memref<4x1x128xf32, #tpu.memory_space<vmem>>, vector<1x1x128xf32>
    %38 = vector.shape_cast %37 : vector<1x1x128xf32> to vector<1x128xf32>
    %39 = vector.broadcast %38 : vector<1x128xf32> to vector<8x128xf32>
    %40 = arith.addf %36, %39 : vector<8x128xf32>
    %41 = arith.truncf %40 : vector<8x128xf32> to vector<8x128xbf16>
    %c0_29 = arith.constant 0 : index
    %c0_30 = arith.constant 0 : index
    %42 = vector.load %arg4[%c0_29, %c0_30] : memref<8x128xbf16, #tpu.memory_space<vmem>>, vector<8x128xbf16>
    tpu.vector_store %arg4[%c0_29, %c0_30], %41 {strides = array<i32>} : memref<8x128xbf16, #tpu.memory_space<vmem>>, vector<8x128xbf16>,
    return
  }
  func.func @transform_0(%arg0: i32) -> (i32, i32) {
    %c0_i32 = arith.constant 0 : i32
    %c0_i32_0 = arith.constant 0 : i32
    return %arg0, %c0_i32 : i32, i32
  }
  func.func @transform_1(%arg0: i32) -> (i32, i32, i32) {
    %c0_i32 = arith.constant 0 : i32
    %c0_i32_0 = arith.constant 0 : i32
    %c0_i32_1 = arith.constant 0 : i32
    %c0_i32_2 = arith.constant 0 : i32
    return %c0_i32, %c0_i32_0, %c0_i32_1 : i32, i32, i32
  }
  func.func @transform_2(%arg0: i32) -> (i32, i32, i32) {
    %c0_i32 = arith.constant 0 : i32
    %c0_i32_0 = arith.constant 0 : i32
    %c0_i32_1 = arith.constant 0 : i32
    %c0_i32_2 = arith.constant 0 : i32
    return %c0_i32, %c0_i32_0, %c0_i32_1 : i32, i32, i32
  }
  func.func @transform_3(%arg0: i32) -> (i32, i32) {
    %c0_i32 = arith.constant 0 : i32
    %c0_i32_0 = arith.constant 0 : i32
    return %arg0, %c0_i32 : i32, i32
  }
}

</mosaic_0001>

<llo_original>
// kernel: tpu_custom_call.1
$region0: #{tpu_custom_call.1}
  #allocation0 [shape = 'u32[]', space=smem, size = 0x4, offset = 0x4, fixed_abs, tag = 'smem constant byte address 0x4 - core index']
  #allocation1 [shape = 'u32[144,128]{1,0:T(1,128)}', space=vmem, size = 0x12000, scoped, tag = 'internal scratch']
  %s0 = inlined_call_operand.hbm [shape: f32[8,64], index: 0, kind: input, shape index: {}]
  %s1 = inlined_call_operand.hbm [shape: bf16[4,128,128], index: 1, kind: input, shape index: {}]
  %s2 = inlined_call_operand.vmem [shape: f32[4,1,128], index: 2, kind: input, shape index: {}]
  %s3 = inlined_call_operand.hbm [shape: bf16[8,128], index: 3, kind: output, shape index: {}]
  %s4 = sld [smem:[#allocation0]]
  $region30: #{tpu_custom_call.1} parent=0
    _
  %s6 = ssub.s32 1, %s4
  %s7 = scalar_select 0, %s6, %s4
  $region1: #{tpu_custom_call.1} parent=0
    #allocation2 [shape = 'u8[4096]{0}', space=vmem, size = 0x1000, scoped, tag = 'input window, operand 0, single buffered']
    #allocation3 [shape = 's32[1]{0}', space=sflag, size = 0x4, scoped, tag = 'scoped memory for tpu_custom_call.1']
    #allocation4 [shape = 's32[1]{0}', space=sflag, size = 0x4, scoped, tag = 'scoped memory for tpu_custom_call.1']
    #allocation5 [shape = 'u8[131072]{0}', space=vmem, size = 0x20000, scoped, tag = 'input window, operand 1, single buffered']
    #allocation6 [shape = 's32[1]{0}', space=sflag, size = 0x4, scoped, tag = 'scoped memory for tpu_custom_call.1']
    #allocation7 [shape = 'u8[2048]{0}', space=vmem, size = 0x800, scoped, tag = 'output window, operand 0, single buffered']
    %8 = vsyncpa [#allocation3], 0
    %9 = vsyncpa [#allocation6], 0
    %10 = vsyncpa [#allocation4], 0
    // Predicated region
    $region2: #{tpu_custom_call.1} parent=1 // pred_check
      _
    $region3: #{tpu_custom_call.1} parent=1 // pred_check_branch
      %12 = sbr.rel (0) target = $region5
    $region4: #{tpu_custom_call.1} parent=1 // pred_region
      %s14 = ssub.s32 128, 128
      %15 = vsyncadd [#allocation3], %s14
      %s17 = sshll.u32 [#allocation2], 4
      %s18 = int_to_ptr.vmem [resolvable:$true] %s17
      %20 = dma.hbm_to_vmem [thread:$0]  %s0, 128, %s18, [#allocation3]
    $region5: #{tpu_custom_call.1} parent=1 // pred_fallthru
      _
    // Predicated region
    $region6: #{tpu_custom_call.1} parent=1 // pred_check
      _
    $region7: #{tpu_custom_call.1} parent=1 // pred_check_branch
      %22 = sbr.rel (0) target = $region9
    $region8: #{tpu_custom_call.1} parent=1 // pred_region
      %s24 = ssub.s32 4096, 4096
      %25 = vsyncadd [#allocation6], %s24
      %s26 = sshll.u32 [#allocation5], 4
      %s27 = int_to_ptr.vmem [resolvable:$true] %s26
      %32 = dma.hbm_to_vmem [thread:$0]  %s1, 4096, %s27, [#allocation6], 64, 64, 4
    $region9: #{tpu_custom_call.1} parent=1 // pred_fallthru
      _
    // Predicated region
    $region10: #{tpu_custom_call.1} parent=1 // pred_check
      _
    $region11: #{tpu_custom_call.1} parent=1 // pred_check_branch
      %34 = sbr.rel (0) target = $region13
    $region12: #{tpu_custom_call.1} parent=1 // pred_region
      _
    $region13: #{tpu_custom_call.1} parent=1 // pred_fallthru
      _
    // Predicated region
    $region14: #{tpu_custom_call.1} parent=1 // pred_check
      _
    $region15: #{tpu_custom_call.1} parent=1 // pred_check_branch
      %36 = sbr.rel (0) target = $region17
    $region16: #{tpu_custom_call.1} parent=1 // pred_region
      %37 = dma.done [#allocation3], 128
    $region17: #{tpu_custom_call.1} parent=1 // pred_fallthru
      _
    // Predicated region
    $region18: #{tpu_custom_call.1} parent=1 // pred_check
      _
    $region19: #{tpu_custom_call.1} parent=1 // pred_check_branch
      %39 = sbr.rel (0) target = $region21
    $region20: #{tpu_custom_call.1} parent=1 // pred_region
      %40 = dma.done [#allocation6], 4096
    $region21: #{tpu_custom_call.1} parent=1 // pred_fallthru
      _
    %v42 = vld [vmem:[#allocation2] sm:$0xff]
    %v43 = vpack.c.bf16 %v42, %v42
    %vm44 = vcmask 523264
    %v47 = vsel %vm44, %v43, 0
    %v49 = vld [vmem:[#allocation5] sm:$0xf]
    %v50 = vld [vmem:[#allocation5 + $0x4] sm:$0xf]
    %v51 = vld [vmem:[#allocation5 + $0x8] sm:$0xf]
    %v52 = vld [vmem:[#allocation5 + $0xc] sm:$0xf]
    %v53 = vld [vmem:[#allocation5 + $0x10] sm:$0xf]
    %v54 = vld [vmem:[#allocation5 + $0x14] sm:$0xf]
    %v55 = vld [vmem:[#allocation5 + $0x18] sm:$0xf]
    %v56 = vld [vmem:[#allocation5 + $0x1c] sm:$0xf]
    %v57 = vld [vmem:[#allocation5 + $0x20] sm:$0xf]
    %v58 = vld [vmem:[#allocation5 + $0x24] sm:$0xf]
    %v59 = vld [vmem:[#allocation5 + $0x28] sm:$0xf]
    %v60 = vld [vmem:[#allocation5 + $0x2c] sm:$0xf]
    %v61 = vld [vmem:[#allocation5 + $0x30] sm:$0xf]
    %v62 = vld [vmem:[#allocation5 + $0x34] sm:$0xf]
    %v63 = vld [vmem:[#allocation5 + $0x38] sm:$0xf]
    %v64 = vld [vmem:[#allocation5 + $0x3c] sm:$0xf]
    %v65 = vld [vmem:[%s2] sm:$0x1]
    %v67 = vlaneseq
    %v68 = vshrl.u32 %v67, 7
    %v69 = vsub.s32 0, %v68
    %v70 = vrot.slane %v65, %v69
    %v88 = vunpack.c.l.b16 %v49
    %v89 = vunpack.c.l.b16 %v50
    %v90 = vunpack.c.l.b16 %v51
    %v91 = vunpack.c.l.b16 %v52
    %v92 = vunpack.c.l.b16 %v53
    %v93 = vunpack.c.l.b16 %v54
    %v94 = vunpack.c.l.b16 %v55
    %v95 = vunpack.c.l.b16 %v56
    %v96 = vunpack.c.l.b16 %v57
    %v97 = vunpack.c.l.b16 %v58
    %v98 = vunpack.c.l.b16 %v59
    %v99 = vunpack.c.l.b16 %v60
    %v100 = vunpack.c.l.b16 %v61
    %v101 = vunpack.c.l.b16 %v62
    %v102 = vunpack.c.l.b16 %v63
    %v103 = vunpack.c.l.b16 %v64
    %v104 = vpack.c.b16 %v89, %v88
    %v105 = vpack.c.b16 %v91, %v90
    %v106 = vpack.c.b16 %v93, %v92
    %v107 = vpack.c.b16 %v95, %v94
    %v108 = vpack.c.b16 %v97, %v96
    %v109 = vpack.c.b16 %v99, %v98
    %v110 = vpack.c.b16 %v101, %v100
    %v111 = vpack.c.b16 %v103, %v102
    %120 = vmatprep.subr.bf16.mxu0 0
    %121 = vmatpush1.bf16.msra.mxu0 %v104
    %122 = vmatprep.subr.bf16.mxu0 0
    %123 = vmatpush1.bf16.msra.mxu0 %v105
    %124 = vmatprep.subr.bf16.mxu0 0
    %125 = vmatpush1.bf16.msra.mxu0 %v106
    %126 = vmatprep.subr.bf16.mxu0 0
    %127 = vmatpush1.bf16.msra.mxu0 %v107
    %128 = vmatprep.subr.bf16.mxu0 0
    %129 = vmatpush1.bf16.msra.mxu0 %v108
    %130 = vmatprep.subr.bf16.mxu0 0
    %131 = vmatpush1.bf16.msra.mxu0 %v109
    %132 = vmatprep.subr.bf16.mxu0 0
    %133 = vmatpush1.bf16.msra.mxu0 %v110
    %134 = vmatprep.subr.bf16.mxu0 0
    %135 = vmatpush1.bf16.msra.mxu0 %v111
    %136 = vmatprep.subr.bf16.mxu0 0
    %137 = vmatpush1.bf16.msra.mxu0 0
    %138 = vmatprep.subr.bf16.mxu0 0
    %139 = vmatpush1.bf16.msra.mxu0 0
    %140 = vmatprep.subr.bf16.mxu0 0
    %141 = vmatpush1.bf16.msra.mxu0 0
    %142 = vmatprep.subr.bf16.mxu0 0
    %143 = vmatpush1.bf16.msra.mxu0 0
    %144 = vmatprep.subr.bf16.mxu0 0
    %145 = vmatpush1.bf16.msra.mxu0 0
    %146 = vmatprep.subr.bf16.mxu0 0
    %147 = vmatpush1.bf16.msra.mxu0 0
    %148 = vmatprep.subr.bf16.mxu0 0
    %149 = vmatpush1.bf16.msra.mxu0 0
    %150 = vmatprep.subr.bf16.mxu0 0
    %151 = vmatpush1.bf16.msra.mxu0 0
    %152 = vmatprep.mubr.bf16.mxu0 0
    %153 = vmatmul.mubr.bf16.gmra.mrb[0].mxu0 %v47
    %v154 = vpop.f32.mrb[0].mxu0
    %v155 = vadd.f32 %v70, %v154
    %v156 = vpop.f32.mrb[0].mxu0
    %v157 = vpop.f32.mrb[0].mxu0
    %v158 = vpop.f32.mrb[0].mxu0
    %159 = vdwg.mxu0
    %v160 = vmax.f32 %v155, 0.0
    %v161 = vpack.c.bf16 %v160, %v160
    %s162 = scalar_lea.vmem [#allocation5], 64
    %v163 = vld [vmem:[%s162] sm:$0xf]
    %v164 = vld [vmem:[%s162 + $0x4] sm:$0xf]
    %v165 = vld [vmem:[%s162 + $0x8] sm:$0xf]
    %v166 = vld [vmem:[%s162 + $0xc] sm:$0xf]
    %v167 = vld [vmem:[%s162 + $0x10] sm:$0xf]
    %v168 = vld [vmem:[%s162 + $0x14] sm:$0xf]
    %v169 = vld [vmem:[%s162 + $0x18] sm:$0xf]
    %v170 = vld [vmem:[%s162 + $0x1c] sm:$0xf]
    %v171 = vld [vmem:[%s162 + $0x20] sm:$0xf]
    %v172 = vld [vmem:[%s162 + $0x24] sm:$0xf]
    %v173 = vld [vmem:[%s162 + $0x28] sm:$0xf]
    %v174 = vld [vmem:[%s162 + $0x2c] sm:$0xf]
    %v175 = vld [vmem:[%s162 + $0x30] sm:$0xf]
    %v176 = vld [vmem:[%s162 + $0x34] sm:$0xf]
    %v177 = vld [vmem:[%s162 + $0x38] sm:$0xf]
    %v178 = vld [vmem:[%s162 + $0x3c] sm:$0xf]
    %s179 = scalar_lea.vmem %s2, 1
    %v180 = vld [vmem:[%s179] sm:$0x1]
    %v182 = vlaneseq
    %v183 = vshrl.u32 %v182, 7
    %v184 = vsub.s32 0, %v183
    %v185 = vrot.slane %v180, %v184
    %v203 = vunpack.c.l.b16 %v163
    %v204 = vunpack.c.l.b16 %v164
    %v205 = vunpack.c.l.b16 %v165
    %v206 = vunpack.c.l.b16 %v166
    %v207 = vunpack.c.l.b16 %v167
    %v208 = vunpack.c.l.b16 %v168
    %v209 = vunpack.c.l.b16 %v169
    %v210 = vunpack.c.l.b16 %v170
    %v211 = vunpack.c.l.b16 %v171
    %v212 = vunpack.c.l.b16 %v172
    %v213 = vunpack.c.l.b16 %v173
    %v214 = vunpack.c.l.b16 %v174
    %v215 = vunpack.c.l.b16 %v175
    %v216 = vunpack.c.l.b16 %v176
    %v217 = vunpack.c.l.b16 %v177
    %v218 = vunpack.c.l.b16 %v178
    %v219 = vpack.c.b16 %v204, %v203
    %v220 = vpack.c.b16 %v206, %v205
    %v221 = vpack.c.b16 %v208, %v207
    %v222 = vpack.c.b16 %v210, %v209
    %v223 = vpack.c.b16 %v212, %v211
    %v224 = vpack.c.b16 %v214, %v213
    %v225 = vpack.c.b16 %v216, %v215
    %v226 = vpack.c.b16 %v218, %v217
    %235 = vmatprep.subr.bf16.mxu0 0
    %236 = vmatpush1.bf16.msra.mxu0 %v219
    %237 = vmatprep.subr.bf16.mxu0 0
    %238 = vmatpush1.bf16.msra.mxu0 %v220
    %239 = vmatprep.subr.bf16.mxu0 0
    %240 = vmatpush1.bf16.msra.mxu0 %v221
    %241 = vmatprep.subr.bf16.mxu0 0
    %242 = vmatpush1.bf16.msra.mxu0 %v222
    %243 = vmatprep.subr.bf16.mxu0 0
    %244 = vmatpush1.bf16.msra.mxu0 %v223
    %245 = vmatprep.subr.bf16.mxu0 0
    %246 = vmatpush1.bf16.msra.mxu0 %v224
    %247 = vmatprep.subr.bf16.mxu0 0
    %248 = vmatpush1.bf16.msra.mxu0 %v225
    %249 = vmatprep.subr.bf16.mxu0 0
    %250 = vmatpush1.bf16.msra.mxu0 %v226
    %251 = vmatprep.subr.bf16.mxu0 0
    %252 = vmatpush1.bf16.msra.mxu0 0
    %253 = vmatprep.subr.bf16.mxu0 0
    %254 = vmatpush1.bf16.msra.mxu0 0
    %255 = vmatprep.subr.bf16.mxu0 0
    %256 = vmatpush1.bf16.msra.mxu0 0
    %257 = vmatprep.subr.bf16.mxu0 0
    %258 = vmatpush1.bf16.msra.mxu0 0
    %259 = vmatprep.subr.bf16.mxu0 0
    %260 = vmatpush1.bf16.msra.mxu0 0
    %261 = vmatprep.subr.bf16.mxu0 0
    %262 = vmatpush1.bf16.msra.mxu0 0
    %263 = vmatprep.subr.bf16.mxu0 0
    %264 = vmatpush1.bf16.msra.mxu0 0
    %265 = vmatprep.subr.bf16.mxu0 0
    %266 = vmatpush1.bf16.msra.mxu0 0
    %267 = vmatprep.mubr.bf16.mxu0 0
    %268 = vmatmul.mubr.bf16.gmra.mrb[0].mxu0 %v161
    %v269 = vpop.f32.mrb[0].mxu0
    %v270 = vadd.f32 %v185, %v269
    %v271 = vpop.f32.mrb[0].mxu0
    %v272 = vpop.f32.mrb[0].mxu0
    %v273 = vpop.f32.mrb[0].mxu0
    %274 = vdwg.mxu0
    %v275 = vmax.f32 %v270, 0.0
    %v276 = vpack.c.bf16 %v275, %v275
    %s277 = scalar_lea.vmem [#allocation5], 128
    %v278 = vld [vmem:[%s277] sm:$0xf]
    %v279 = vld [vmem:[%s277 + $0x4] sm:$0xf]
    %v280 = vld [vmem:[%s277 + $0x8] sm:$0xf]
    %v281 = vld [vmem:[%s277 + $0xc] sm:$0xf]
    %v282 = vld [vmem:[%s277 + $0x10] sm:$0xf]
    %v283 = vld [vmem:[%s277 + $0x14] sm:$0xf]
    %v284 = vld [vmem:[%s277 + $0x18] sm:$0xf]
    %v285 = vld [vmem:[%s277 + $0x1c] sm:$0xf]
    %v286 = vld [vmem:[%s277 + $0x20] sm:$0xf]
    %v287 = vld [vmem:[%s277 + $0x24] sm:$0xf]
    %v288 = vld [vmem:[%s277 + $0x28] sm:$0xf]
    %v289 = vld [vmem:[%s277 + $0x2c] sm:$0xf]
    %v290 = vld [vmem:[%s277 + $0x30] sm:$0xf]
    %v291 = vld [vmem:[%s277 + $0x34] sm:$0xf]
    %v292 = vld [vmem:[%s277 + $0x38] sm:$0xf]
    %v293 = vld [vmem:[%s277 + $0x3c] sm:$0xf]
    %s294 = scalar_lea.vmem %s2, 2
    %v295 = vld [vmem:[%s294] sm:$0x1]
    %v297 = vlaneseq
    %v298 = vshrl.u32 %v297, 7
    %v299 = vsub.s32 0, %v298
    %v300 = vrot.slane %v295, %v299
    %v318 = vunpack.c.l.b16 %v278
    %v319 = vunpack.c.l.b16 %v279
    %v320 = vunpack.c.l.b16 %v280
    %v321 = vunpack.c.l.b16 %v281
    %v322 = vunpack.c.l.b16 %v282
    %v323 = vunpack.c.l.b16 %v283
    %v324 = vunpack.c.l.b16 %v284
    %v325 = vunpack.c.l.b16 %v285
    %v326 = vunpack.c.l.b16 %v286
    %v327 = vunpack.c.l.b16 %v287
    %v328 = vunpack.c.l.b16 %v288
    %v329 = vunpack.c.l.b16 %v289
    %v330 = vunpack.c.l.b16 %v290
    %v331 = vunpack.c.l.b16 %v291
    %v332 = vunpack.c.l.b16 %v292
    %v333 = vunpack.c.l.b16 %v293
    %v334 = vpack.c.b16 %v319, %v318
    %v335 = vpack.c.b16 %v321, %v320
    %v336 = vpack.c.b16 %v323, %v322
    %v337 = vpack.c.b16 %v325, %v324
    %v338 = vpack.c.b16 %v327, %v326
    %v339 = vpack.c.b16 %v329, %v328
    %v340 = vpack.c.b16 %v331, %v330
    %v341 = vpack.c.b16 %v333, %v332
    %350 = vmatprep.subr.bf16.mxu0 0
    %351 = vmatpush1.bf16.msra.mxu0 %v334
    %352 = vmatprep.subr.bf16.mxu0 0
    %353 = vmatpush1.bf16.msra.mxu0 %v335
    %354 = vmatprep.subr.bf16.mxu0 0
    %355 = vmatpush1.bf16.msra.mxu0 %v336
    %356 = vmatprep.subr.bf16.mxu0 0
    %357 = vmatpush1.bf16.msra.mxu0 %v337
    %358 = vmatprep.subr.bf16.mxu0 0
    %359 = vmatpush1.bf16.msra.mxu0 %v338
    %360 = vmatprep.subr.bf16.mxu0 0
    %361 = vmatpush1.bf16.msra.mxu0 %v339
    %362 = vmatprep.subr.bf16.mxu0 0
    %363 = vmatpush1.bf16.msra.mxu0 %v340
    %364 = vmatprep.subr.bf16.mxu0 0
    %365 = vmatpush1.bf16.msra.mxu0 %v341
    %366 = vmatprep.subr.bf16.mxu0 0
    %367 = vmatpush1.bf16.msra.mxu0 0
    %368 = vmatprep.subr.bf16.mxu0 0
    %369 = vmatpush1.bf16.msra.mxu0 0
    %370 = vmatprep.subr.bf16.mxu0 0
    %371 = vmatpush1.bf16.msra.mxu0 0
    %372 = vmatprep.subr.bf16.mxu0 0
    %373 = vmatpush1.bf16.msra.mxu0 0
    %374 = vmatprep.subr.bf16.mxu0 0
    %375 = vmatpush1.bf16.msra.mxu0 0
    %376 = vmatprep.subr.bf16.mxu0 0
    %377 = vmatpush1.bf16.msra.mxu0 0
    %378 = vmatprep.subr.bf16.mxu0 0
    %379 = vmatpush1.bf16.msra.mxu0 0
    %380 = vmatprep.subr.bf16.mxu0 0
    %381 = vmatpush1.bf16.msra.mxu0 0
    %382 = vmatprep.mubr.bf16.mxu0 0
    %383 = vmatmul.mubr.bf16.gmra.mrb[0].mxu0 %v276
    %v384 = vpop.f32.mrb[0].mxu0
    %v385 = vadd.f32 %v300, %v384
    %v386 = vpop.f32.mrb[0].mxu0
    %v387 = vpop.f32.mrb[0].mxu0
    %v388 = vpop.f32.mrb[0].mxu0
    %389 = vdwg.mxu0
    %v390 = vmax.f32 %v385, 0.0
    %v391 = vpack.c.bf16 %v390, %v390
    %s392 = scalar_lea.vmem [#allocation5], 192
    %v393 = vld [vmem:[%s392] sm:$0xf]
    %v394 = vld [vmem:[%s392 + $0x4] sm:$0xf]
    %v395 = vld [vmem:[%s392 + $0x8] sm:$0xf]
    %v396 = vld [vmem:[%s392 + $0xc] sm:$0xf]
    %v397 = vld [vmem:[%s392 + $0x10] sm:$0xf]
    %v398 = vld [vmem:[%s392 + $0x14] sm:$0xf]
    %v399 = vld [vmem:[%s392 + $0x18] sm:$0xf]
    %v400 = vld [vmem:[%s392 + $0x1c] sm:$0xf]
    %v401 = vld [vmem:[%s392 + $0x20] sm:$0xf]
    %v402 = vld [vmem:[%s392 + $0x24] sm:$0xf]
    %v403 = vld [vmem:[%s392 + $0x28] sm:$0xf]
    %v404 = vld [vmem:[%s392 + $0x2c] sm:$0xf]
    %v405 = vld [vmem:[%s392 + $0x30] sm:$0xf]
    %v406 = vld [vmem:[%s392 + $0x34] sm:$0xf]
    %v407 = vld [vmem:[%s392 + $0x38] sm:$0xf]
    %v408 = vld [vmem:[%s392 + $0x3c] sm:$0xf]
    %s409 = scalar_lea.vmem %s2, 3
    %v410 = vld [vmem:[%s409] sm:$0x1]
    %v412 = vlaneseq
    %v413 = vshrl.u32 %v412, 7
    %v414 = vsub.s32 0, %v413
    %v415 = vrot.slane %v410, %v414
    %v433 = vunpack.c.l.b16 %v393
    %v434 = vunpack.c.l.b16 %v394
    %v435 = vunpack.c.l.b16 %v395
    %v436 = vunpack.c.l.b16 %v396
    %v437 = vunpack.c.l.b16 %v397
    %v438 = vunpack.c.l.b16 %v398
    %v439 = vunpack.c.l.b16 %v399
    %v440 = vunpack.c.l.b16 %v400
    %v441 = vunpack.c.l.b16 %v401
    %v442 = vunpack.c.l.b16 %v402
    %v443 = vunpack.c.l.b16 %v403
    %v444 = vunpack.c.l.b16 %v404
    %v445 = vunpack.c.l.b16 %v405
    %v446 = vunpack.c.l.b16 %v406
    %v447 = vunpack.c.l.b16 %v407
    %v448 = vunpack.c.l.b16 %v408
    %v449 = vpack.c.b16 %v434, %v433
    %v450 = vpack.c.b16 %v436, %v435
    %v451 = vpack.c.b16 %v438, %v437
    %v452 = vpack.c.b16 %v440, %v439
    %v453 = vpack.c.b16 %v442, %v441
    %v454 = vpack.c.b16 %v444, %v443
    %v455 = vpack.c.b16 %v446, %v445
    %v456 = vpack.c.b16 %v448, %v447
    %465 = vmatprep.subr.bf16.mxu0 0
    %466 = vmatpush1.bf16.msra.mxu0 %v449
    %467 = vmatprep.subr.bf16.mxu0 0
    %468 = vmatpush1.bf16.msra.mxu0 %v450
    %469 = vmatprep.subr.bf16.mxu0 0
    %470 = vmatpush1.bf16.msra.mxu0 %v451
    %471 = vmatprep.subr.bf16.mxu0 0
    %472 = vmatpush1.bf16.msra.mxu0 %v452
    %473 = vmatprep.subr.bf16.mxu0 0
    %474 = vmatpush1.bf16.msra.mxu0 %v453
    %475 = vmatprep.subr.bf16.mxu0 0
    %476 = vmatpush1.bf16.msra.mxu0 %v454
    %477 = vmatprep.subr.bf16.mxu0 0
    %478 = vmatpush1.bf16.msra.mxu0 %v455
    %479 = vmatprep.subr.bf16.mxu0 0
    %480 = vmatpush1.bf16.msra.mxu0 %v456
    %481 = vmatprep.subr.bf16.mxu0 0
    %482 = vmatpush1.bf16.msra.mxu0 0
    %483 = vmatprep.subr.bf16.mxu0 0
    %484 = vmatpush1.bf16.msra.mxu0 0
    %485 = vmatprep.subr.bf16.mxu0 0
    %486 = vmatpush1.bf16.msra.mxu0 0
    %487 = vmatprep.subr.bf16.mxu0 0
    %488 = vmatpush1.bf16.msra.mxu0 0
    %489 = vmatprep.subr.bf16.mxu0 0
    %490 = vmatpush1.bf16.msra.mxu0 0
    %491 = vmatprep.subr.bf16.mxu0 0
    %492 = vmatpush1.bf16.msra.mxu0 0
    %493 = vmatprep.subr.bf16.mxu0 0
    %494 = vmatpush1.bf16.msra.mxu0 0
    %495 = vmatprep.subr.bf16.mxu0 0
    %496 = vmatpush1.bf16.msra.mxu0 0
    %497 = vmatprep.mubr.bf16.mxu0 0
    %498 = vmatmul.mubr.bf16.gmra.mrb[0].mxu0 %v391
    %v499 = vpop.f32.mrb[0].mxu0
    %v500 = vadd.f32 %v415, %v499
    %v501 = vpop.f32.mrb[0].mxu0
    %v502 = vpop.f32.mrb[0].mxu0
    %v503 = vpop.f32.mrb[0].mxu0
    %504 = vdwg.mxu0
    %v505 = vpack.c.bf16 %v500, %v500
    %506 = vst [vmem:[#allocation7] sm:$0xf] %v505
    // Predicated region
    $region22: #{tpu_custom_call.1} parent=1 // pred_check
      _
    $region23: #{tpu_custom_call.1} parent=1 // pred_check_branch
      %508 = sbr.rel (0) target = $region25
    $region24: #{tpu_custom_call.1} parent=1 // pred_region
      %s510 = ssub.s32 64, 64
      %511 = vsyncadd [#allocation4], %s510
      %s513 = sshll.u32 [#allocation7], 4
      %s514 = int_to_ptr.vmem [resolvable:$true] %s513
      %516 = dma.vmem_to_hbm [thread:$0]  %s514, 64, %s3, [#allocation4]
    $region25: #{tpu_custom_call.1} parent=1 // pred_fallthru
      _
    // Predicated region
    $region26: #{tpu_custom_call.1} parent=1 // pred_check
      _
    $region27: #{tpu_custom_call.1} parent=1 // pred_check_branch
      %518 = sbr.rel (0) target = $region29
    $region28: #{tpu_custom_call.1} parent=1 // pred_region
      %519 = dma.done [#allocation4], 64
    $region29: #{tpu_custom_call.1} parent=1 // pred_fallthru
      _
    %520 = vsyncpa [#allocation3], 1
    %521 = vsyncpa [#allocation6], 1
    %522 = vsyncpa [#allocation4], 1

</llo_original>
